<compile_context>
chip_gen: v5e
topology: v5e:2x2
jax: 0.10.0
libtpu: 0.0.40
codegen_flags: <defaults>
</compile_context>

<pallas_src>
import functools

import jax
import jax.numpy as jnp
from jax.experimental import pallas as pl
from jax.experimental.pallas import tpu as pltpu


def _round_up(x: int, m: int) -> int:
    return (x + m - 1) // m * m


_INT32_MIN = int(jnp.iinfo(jnp.int32).min)


# --------------------------------------------------------------------------
# Kernel 1: per-class one-hot indicator matrix (ecs), tiled over n_samples
# --------------------------------------------------------------------------
def _ecs_kernel(yu_ref, y_ref, ecs_ref):
    # yu_ref : VMEM (c_pad, 1) int32   (padded rows hold a non-matching sentinel)
    # y_ref  : VMEM (1, bs)    int32   (padded lanes hold a different sentinel)
    # ecs_ref: VMEM (c_pad, bs)
    # One broadcast compare -> one VPU op per (8,128) tile, no XLU, no spills.
    ecs_ref[...] = (yu_ref[...] == y_ref[...]).astype(ecs_ref.dtype)


def compute_ecs(
    y: jax.Array,
    y_unique: jax.Array,
    *,
    block_s: int = 32768,
    ecs_dtype=jnp.float32,          # torch reference uses float32
    padded: bool = False,
    vmem_budget: int = 8 << 20,
) -> jax.Array:
    n_samples = int(y.shape[0])
    n_classes = int(y_unique.shape[0])
    c_pad = _round_up(n_classes, 8)                     # sublane-aligned rows
    ecs_bytes = jnp.dtype(ecs_dtype).itemsize

    # Lane-dense sample block, as wide as the (double-buffered) VMEM budget
    # allows; wide blocks amortize per-grid-step overhead on this
    # HBM-write-bound kernel.
    bs_cap = max(128, (vmem_budget // (2 * (c_pad * ecs_bytes + 4))) // 128 * 128)
    bs = min(block_s, bs_cap, _round_up(n_samples, 128))
    # Keep >= 2 grid steps when there is enough work so the "parallel" sample
    # axis can shard across both TensorCores on v7x.
    if _round_up(n_samples, bs) == bs and n_samples > 1024:
        bs = _round_up(pl.cdiv(n_samples, 2), 128)
    n_pad = _round_up(n_samples, bs)

    # Sentinel padding: padded sample lanes / class rows never match anything
    # (and never match each other), so the padded region of ecs is exactly
    # zero — no post-kernel masking or slicing is semantically required.
    y_row = jnp.full((1, n_pad), _INT32_MIN, jnp.int32)
    y_row = y_row.at[0, :n_samples].set(y.astype(jnp.int32))
    yu_col = jnp.full((c_pad, 1), _INT32_MIN + 1, jnp.int32)
    yu_col = yu_col.at[:n_classes, 0].set(y_unique.astype(jnp.int32))

    ecs_padded = pl.pallas_call(
        _ecs_kernel,
        out_shape=jax.ShapeDtypeStruct((c_pad, n_pad), ecs_dtype),
        grid=(n_pad // bs,),
        in_specs=[
            pl.BlockSpec((c_pad, 1), lambda i: (0, 0)),   # y_unique column (resident)
            pl.BlockSpec((1, bs), lambda i: (0, i)),      # sample block
        ],
        out_specs=pl.BlockSpec((c_pad, bs), lambda i: (0, i)),
        compiler_params=pltpu.CompilerParams(dimension_semantics=("parallel",)),
    )(yu_col, y_row)

    if padded or (c_pad == n_classes and n_pad == n_samples):
        return ecs_padded          # padded region is all zeros -> safe to consume
    return ecs_padded[:n_classes, :n_samples]


# --------------------------------------------------------------------------
# Kernel 2: linear projector  Xp = X @ W
# --------------------------------------------------------------------------
def _proj_fast_kernel(x_ref, w_ref, o_ref, *, mxu_dtype):
    x = x_ref[...]
    if mxu_dtype is not None and x.dtype != mxu_dtype:
        x = x.astype(mxu_dtype)     # in-kernel cast: no wrapper X HBM round trip
    o_ref[...] = jnp.dot(x, w_ref[...], preferred_element_type=jnp.float32
                         ).astype(o_ref.dtype)


def _proj_tiled_kernel(x_ref, w_ref, o_ref):
    # Output block is resident across the K axis (index_map ignores k), so we
    # accumulate directly into the f32 output — no VMEM accumulator scratch.
    @pl.when(pl.program_id(2) == 0)
    def _():
        o_ref[...] = jnp.zeros_like(o_ref)

    o_ref[...] += jnp.dot(x_ref[...], w_ref[...],
                          preferred_element_type=jnp.float32)


def project(
    X: jax.Array,
    W: jax.Array,
    *,
    tm: int = 512,
    tn: int = 256,
    tk: int = 512,
    mxu_dtype=jnp.bfloat16,
    out_dtype=jnp.float32,
    fast_vmem_budget: int = 12 << 20,   # fits v5e/v6e/v7x default scoped VMEM
) -> jax.Array:
    M, K = X.shape
    K2, N = W.shape
    assert K == K2
    x_bytes = X.dtype.itemsize
    w_bytes = (jnp.dtype(mxu_dtype).itemsize if mxu_dtype is not None
               else W.dtype.itemsize)

    def _fast_bytes(tm_):
        # double-buffered X + out blocks, one resident W block
        return 2 * tm_ * K * x_bytes + K * N * w_bytes + 2 * tm_ * N * 4

    if _fast_bytes(8) <= fast_vmem_budget:
        # ------ fast path: grid over samples only; K and N kept whole ------
        # No padding of X, no wrapper pad/cast copy, no post-kernel slice.
        Wc = W.astype(mxu_dtype) if mxu_dtype is not None else W   # tiny cast
        tm_f = min(2048, _round_up(M, 8))
        while tm_f > 8 and _fast_bytes(tm_f) > fast_vmem_budget:
            tm_f //= 2
        tm_f = max(8, tm_f // 8 * 8)
        grid_m = pl.cdiv(M, tm_f)

        cost = pl.CostEstimate(
            flops=2 * M * N * K, transcendentals=0,
            bytes_accessed=M * K * x_bytes + K * N * w_bytes + M * N * 4)

        return pl.pallas_call(
            functools.partial(_proj_fast_kernel, mxu_dtype=mxu_dtype),
            out_shape=jax.ShapeDtypeStruct((M, N), out_dtype),
            grid=(grid_m,),
            in_specs=[
                pl.BlockSpec((tm_f, K), lambda i: (i, 0)),
                pl.BlockSpec((K, N), lambda i: (0, 0)),
            ],
            out_specs=pl.BlockSpec((tm_f, N), lambda i: (i, 0)),
            compiler_params=pltpu.CompilerParams(
                dimension_semantics=("parallel",)),
            cost_estimate=cost,
        )(X, Wc)

    # ------ fallback: large K and/or N -> 3-D (M, N, K) MXU tiling ------
    # TODO(synk): the wrapper pad+cast of X costs one extra HBM round trip;
    #             acceptable here because this path is MXU-bound.
    in_dtype = mxu_dtype if mxu_dtype is not None else X.dtype
    tm = min(tm, _round_up(M, 128))
    tn = min(tn, _round_up(N, 128))
    tk = min(tk, _round_up(K, 128))
    Mp, Np, Kp = _round_up(M, tm), _round_up(N, tn), _round_up(K, tk)
    Xp = jnp.pad(X.astype(in_dtype), ((0, Mp - M), (0, Kp - K)))
    Wp = jnp.pad(W.astype(in_dtype), ((0, Kp - K), (0, Np - N)))

    out = pl.pallas_call(
        _proj_tiled_kernel,
        out_shape=jax.ShapeDtypeStruct((Mp, Np), jnp.float32),
        grid=(Mp // tm, Np // tn, Kp // tk),
        in_specs=[
            pl.BlockSpec((tm, tk), lambda i, j, k: (i, k)),
            pl.BlockSpec((tk, tn), lambda i, j, k: (k, j)),
        ],
        out_specs=pl.BlockSpec((tm, tn), lambda i, j, k: (i, j)),
        compiler_params=pltpu.CompilerParams(
            dimension_semantics=("parallel", "parallel", "arbitrary")),
    )(Xp, Wp)
    if Mp != M or Np != N:
        out = out[:M, :N]
    return out.astype(out_dtype)


# --------------------------------------------------------------------------
# Module-level wrapper mirroring GradientBasedSLObjective._prepare_ + projector
# --------------------------------------------------------------------------
class GradientBasedSLObjectivePallas:
    def __init__(self, W_projector: jax.Array, mxu_dtype=jnp.bfloat16):
        self.W = W_projector          # deterministic "projector" parameters
        self.mxu_dtype = mxu_dtype

    def prepare(self, X, y, y_unique=None):
        if y_unique is None:
            # NOTE: jnp.unique without a static `size` is not jit-compatible;
            # pass y_unique explicitly (or jnp.unique(y, size=n_classes))
            # when tracing under jax.jit.
            y_unique = jnp.unique(y)
        self._X = X
        self._y = y
        self._y_unique = y_unique
        self.ecs = compute_ecs(y, y_unique)          # (n_classes, n_samples) f32
        self.n_classes = int(y_unique.shape[0])
        self.n_samples = int(y.shape[0])
        self.ori_dim = int(X.shape[1])
        self.dim = int(X.shape[1])
        return self.ecs

    def __call__(self, X, y, y_unique=None):
        ecs = self.prepare(X, y, y_unique)
        Xp = project(X, self.W, mxu_dtype=self.mxu_dtype)   # projector(X)
        return ecs, Xp


if __name__ == "__main__":
    n_samples, dim, n_classes, out_dim = 64, 32, 4, 16

    key = jax.random.PRNGKey(0)
    kx, kw = jax.random.split(key)
    X = jax.random.normal(kx, (n_samples, dim), dtype=jnp.float32)
    y = (jnp.arange(n_samples, dtype=jnp.int32) % n_classes).astype(jnp.int32)
    y_unique = jnp.arange(n_classes, dtype=jnp.int32)
    W = jax.random.normal(kw, (dim, out_dim), dtype=jnp.float32) * 0.1

    module = GradientBasedSLObjectivePallas(W)
    ecs, Xp = module(X, y, y_unique)
    jax.block_until_ready((ecs, Xp))

    # correctness checks against plain JAX reference
    ecs_ref = (y[None, :] == y_unique[:, None]).astype(jnp.float32)
    Xp_ref = X @ W
    assert ecs.shape == (n_classes, n_samples) and ecs.dtype == jnp.float32
    assert Xp.shape == (n_samples, out_dim)
    assert jnp.allclose(ecs, ecs_ref)
    # bf16 MXU inputs with f32 accumulation -> loosened tolerance vs f32 ref.
    assert jnp.allclose(Xp, Xp_ref, atol=3e-2, rtol=3e-2)

    print("KERNEL_OK")
</pallas_src>

<mosaic_0001>
module attributes {stable_mosaic.version = 11 : i64} {
  func.func @_ecs_kernel(%arg0: i32, %arg1: memref<8x1xi32, #tpu.memory_space<vmem>>, %arg2: memref<1x128xi32, #tpu.memory_space<vmem>>, %arg3: memref<8x128xf32, #tpu.memory_space<vmem>>) attributes {dimension_semantics = [#tpu.dimension_semantics<parallel>], iteration_bounds = array<i64: 1>, scalar_prefetch = 0 : i64, scratch_operands = 0 : i64, tpu.core_type = #tpu.core_type<tc>, window_params = [{pipeline_mode = #tpu.pipeline_mode<synchronous>, transform_indices = @transform_0, window_bounds = array<i64: 8, 1>}, {transform_indices = @transform_1, window_bounds = array<i64: 1, 128>}, {transform_indices = @transform_2, window_bounds = array<i64: 8, 128>}]} {
    %c0 = arith.constant 0 : index
    %c0_0 = arith.constant 0 : index
    %0 = vector.load %arg1[%c0, %c0_0] : memref<8x1xi32, #tpu.memory_space<vmem>>, vector<8x1xi32>
    %c0_1 = arith.constant 0 : index
    %c0_2 = arith.constant 0 : index
    %1 = vector.load %arg2[%c0_1, %c0_2] : memref<1x128xi32, #tpu.memory_space<vmem>>, vector<1x128xi32>
    %2 = vector.broadcast %0 : vector<8x1xi32> to vector<8x128xi32>
    %3 = vector.broadcast %1 : vector<1x128xi32> to vector<8x128xi32>
    %4 = arith.cmpi eq, %2, %3 : vector<8x128xi32>
    %5 = arith.extui %4 : vector<8x128xi1> to vector<8x128xi32>
    %6 = arith.sitofp %5 : vector<8x128xi32> to vector<8x128xf32>
    %c0_3 = arith.constant 0 : index
    %c0_4 = arith.constant 0 : index
    %7 = vector.load %arg3[%c0_3, %c0_4] : memref<8x128xf32, #tpu.memory_space<vmem>>, vector<8x128xf32>
    tpu.vector_store %arg3[%c0_3, %c0_4], %6 {strides = array<i32>} : memref<8x128xf32, #tpu.memory_space<vmem>>, vector<8x128xf32>,
    return
  }
  func.func @transform_0(%arg0: i32) -> (i32, i32) {
    %c0_i32 = arith.constant 0 : i32
    %c0_i32_0 = arith.constant 0 : i32
    %c0_i32_1 = arith.constant 0 : i32
    return %c0_i32, %c0_i32_0 : i32, i32
  }
  func.func @transform_1(%arg0: i32) -> (i32, i32) {
    %c0_i32 = arith.constant 0 : i32
    %c0_i32_0 = arith.constant 0 : i32
    return %c0_i32, %arg0 : i32, i32
  }
  func.func @transform_2(%arg0: i32) -> (i32, i32) {
    %c0_i32 = arith.constant 0 : i32
    %c0_i32_0 = arith.constant 0 : i32
    return %c0_i32, %arg0 : i32, i32
  }
}

</mosaic_0001>

<llo_original>
// kernel: tpu_custom_call.1
$region0: #{tpu_custom_call.1}
  #allocation0 [shape = 'u32[]', space=smem, size = 0x4, offset = 0x4, fixed_abs, tag = 'smem constant byte address 0x4 - core index']
  #allocation1 [shape = 'u32[72,128]{1,0:T(1,128)}', space=vmem, size = 0x9000, scoped, tag = 'internal scratch']
  %s0 = inlined_call_operand.vmem [shape: s32[8,1], index: 0, kind: input, shape index: {}]
  %s1 = inlined_call_operand.vmem [shape: s32[1,128], index: 1, kind: input, shape index: {}]
  %s2 = inlined_call_operand.hbm [shape: f32[8,128], index: 2, kind: output, shape index: {}]
  %s3 = sld [smem:[#allocation0]]
  $region18: #{tpu_custom_call.1} parent=0
    _
  %s5 = ssub.s32 1, %s3
  %s6 = scalar_select 0, %s5, %s3
  $region1: #{tpu_custom_call.1} parent=0
    #allocation2 [shape = 'u8[4096]{0}', space=vmem, size = 0x1000, scoped, tag = 'output window, operand 0, single buffered']
    #allocation3 [shape = 's32[1]{0}', space=sflag, size = 0x4, scoped, tag = 'scoped memory for tpu_custom_call.1']
    %7 = vsyncpa [#allocation3], 0
    // Predicated region
    $region2: #{tpu_custom_call.1} parent=1 // pred_check
      _
    $region3: #{tpu_custom_call.1} parent=1 // pred_check_branch
      %9 = sbr.rel (0) target = $region5
    $region4: #{tpu_custom_call.1} parent=1 // pred_region
      _
    $region5: #{tpu_custom_call.1} parent=1 // pred_fallthru
      _
    // Predicated region
    $region6: #{tpu_custom_call.1} parent=1 // pred_check
      _
    $region7: #{tpu_custom_call.1} parent=1 // pred_check_branch
      %11 = sbr.rel (0) target = $region9
    $region8: #{tpu_custom_call.1} parent=1 // pred_region
      _
    $region9: #{tpu_custom_call.1} parent=1 // pred_fallthru
      _
    %v12 = vld [vmem:[%s0] sm:$0xff]
    %v13 = vld [vmem:[%s1] sm:$0x1]
    %14 = vset.pattern.permute.xlu0 0
    %15 = vperm.xlu0 %14, %v12
    %v16 = vpop.permute.xlu0 %15
    %v17 = vperm.slane %v13, 0
    %vm18 = vcmp.eq.s32.totalorder %v16, %v17
    %v19 = vsel %vm18, 1, 0
    %v20 = vcvt.s32.f32 %v19
    %21 = vst [vmem:[#allocation2] sm:$0xff] %v20
    // Predicated region
    $region10: #{tpu_custom_call.1} parent=1 // pred_check
      _
    $region11: #{tpu_custom_call.1} parent=1 // pred_check_branch
      %23 = sbr.rel (0) target = $region13
    $region12: #{tpu_custom_call.1} parent=1 // pred_region
      %25 = vsyncadd [#allocation3], 0
      %s27 = sshll.u32 [#allocation2], 4
      %s28 = int_to_ptr.vmem [resolvable:$true] %s27
      %s29 = sshll.u32 %s2, 4
      %s30 = int_to_ptr.hbm [resolvable:$true] %s29
      %32 = dma.vmem_to_hbm [thread:$0]  %s28, 128, %s30, [#allocation3]
    $region13: #{tpu_custom_call.1} parent=1 // pred_fallthru
      _
    // Predicated region
    $region14: #{tpu_custom_call.1} parent=1 // pred_check
      _
    $region15: #{tpu_custom_call.1} parent=1 // pred_check_branch
      %34 = sbr.rel (0) target = $region17
    $region16: #{tpu_custom_call.1} parent=1 // pred_region
      %36 = dma.done [#allocation3], 128
    $region17: #{tpu_custom_call.1} parent=1 // pred_fallthru
      _
    %37 = vsyncpa [#allocation3], 1

</llo_original>
